<compile_context>
chip_gen: v5e
topology: v5e:2x2
jax: 0.10.0
libtpu: 0.0.40
codegen_flags: <defaults>
</compile_context>

<pallas_src>
import jax
import jax.numpy as jnp
import numpy as np
from jax import lax
from jax.experimental import pallas as pl
from jax.experimental.pallas import tpu as pltpu


# --------------------------- fused model kernel -----------------------------
def _make_fused_kernel(B, L, O, D, H):
    """Build the fused kernel for static shapes (B, L, O, D, H)."""
    N = B * O                      # number of LSTM sequences
    G = 4 * H                      # gate width (PyTorch order i, f, g, o)

    dn_nt = (((1,), (0,)), ((), ()))   # a @ b        (contract last-of-a, first-of-b)
    dn_tt = (((1,), (1,)), ((), ()))   # a @ b.T      (contract last dims)

    # Which (sequence n, timestep t) hidden rows feed the head:
    # torch lstm_out.reshape(B, L, O, H)[:, -1] over the flat (N*L, H) buffer
    # => flat row m = b*L*O + (L-1)*O + o, and (n, t) = divmod(m, L).
    rows = []                                   # in (b, o) lexicographic order
    for b in range(B):
        for o in range(O):
            n, t = divmod(b * L * O + (L - 1) * O + o, L)
            rows.append((n, t))
    needed_ts = sorted({t for (_, t) in rows})

    # Row offsets inside the packed weight buffer (all 4H lanes wide).
    r_wih = 0                  # rows [0, D)        : w_ih^T           (D, 4H)
    r_whh = r_wih + D          # rows [D, D+H)      : w_hh^T           (H, 4H)
    r_wlin = r_whh + H         # rows [D+H, D+2H)   : w_lin^T padded   (H, 4H), valid lanes [0, H)
    r_bias = r_wlin + H        # row  D+2H          : b_ih + b_hh      (1, 4H)
    r_blin = r_bias + 1        # row  D+2H+1        : b_lin padded     (1, 4H), valid lanes [0, H)
    n_rows = r_blin + 1

    def kernel(x_ref, w_ref, out_ref):
        # x_ref: (L*N, D) time-major inputs; w_ref: (n_rows, 4H) packed weights;
        # out_ref: (B*O, O).
        wih_t = w_ref[r_wih:r_whh, :]                  # (D, 4H)
        whh_t = w_ref[r_whh:r_wlin, :]                 # (H, 4H)
        wlin_t = w_ref[r_wlin:r_bias, :]               # (H, 4H), zero-padded lanes [H, 4H)
        bias = w_ref[r_bias:r_bias + 1, :]             # (1, 4H)
        blin = w_ref[r_blin:r_blin + 1, :]             # (1, 4H), zero-padded lanes [H, 4H)

        # Single batched input projection -- completely off the serial h-chain.
        px_all = lax.dot_general(x_ref[...], wih_t, dn_nt,
                                 preferred_element_type=jnp.float32) + bias  # (L*N, 4H)

        # Statically unrolled LSTM recurrence (gate order i, f, g, o).
        h = jnp.zeros((N, H), jnp.float32)
        c = jnp.zeros((N, H), jnp.float32)
        saved_h = {}
        for t in range(L):
            gates = px_all[t * N:(t + 1) * N, :] + lax.dot_general(
                h, whh_t, dn_nt, preferred_element_type=jnp.float32)        # (N, 4H)
            sg = jax.nn.sigmoid(gates)               # one EUP pass over the full vreg
            i_g = sg[:, 0:H]
            f_g = sg[:, H:2 * H]
            o_g = sg[:, 3 * H:4 * H]
            g_g = jnp.tanh(gates[:, 2 * H:3 * H])
            c = f_g * c + i_g * g_g
            h = o_g * jnp.tanh(c)
            if t in needed_ts:
                saved_h[t] = h                       # trace-time reference, no copy

        # Head: gather the needed rows once (off the chain), one batched linear,
        # per-batch (O,H)x(H,O) products, single lane-contiguous writeback.
        y_all = jnp.concatenate(
            [saved_h[t][n:n + 1, :] for (n, t) in rows], axis=0)            # (B*O, H)
        z_all = lax.dot_general(y_all, wlin_t, dn_nt,
                                preferred_element_type=jnp.float32) + blin  # (B*O, 4H)
        z_all = z_all[:, 0:H]                                               # valid lanes
        outs = []
        for b in range(B):
            y_b = y_all[b * O:(b + 1) * O, :]
            z_b = z_all[b * O:(b + 1) * O, :]
            outs.append(lax.dot_general(z_b, y_b, dn_tt,
                                        preferred_element_type=jnp.float32))  # (O, O)
        out_ref[...] = jnp.concatenate(outs, axis=0)                        # (B*O, O)

    return kernel, n_rows


# ------------------------------- full model ---------------------------------
@jax.jit
def model_forward(X, params):
    B, L, O, D = X.shape
    H = params["w_hh"].shape[1]
    G = 4 * H
    N = B * O

    kernel, n_rows = _make_fused_kernel(B, L, O, D, H)

    # torch X.view(B*O, L, D), then time-major flatten (L*N, D) for the batched
    # input projection (tiny 4 KB transpose in XLA, outside the kernel).
    x2d = jnp.reshape(
        jnp.transpose(jnp.reshape(X, (N, L, D)), (1, 0, 2)), (L * N, D))

    # Pack all weights / biases into ONE f32 operand (one DMA instead of six).
    w = jnp.zeros((n_rows, G), jnp.float32)
    w = w.at[0:D, :].set(params["w_ih"].T)                          # w_ih^T
    w = w.at[D:D + H, :].set(params["w_hh"].T)                      # w_hh^T
    w = w.at[D + H:D + 2 * H, 0:H].set(params["w_lin"].T)           # w_lin^T (padded)
    w = w.at[D + 2 * H, :].set(params["b_ih"] + params["b_hh"])     # combined bias
    w = w.at[D + 2 * H + 1, 0:H].set(params["b_lin"])               # b_lin (padded)

    vmem = lambda: pl.BlockSpec(memory_space=pltpu.MemorySpace.VMEM)
    out2d = pl.pallas_call(
        kernel,
        out_shape=jax.ShapeDtypeStruct((N, O), jnp.float32),
        in_specs=[vmem(), vmem()],
        out_specs=vmem(),
    )(x2d, w)

    # (B*O, O) and (B, 1, O, O) share the same row-major layout.
    return jnp.reshape(out2d, (B, 1, O, O))


# ------------------------------- reference ----------------------------------
def _ref_forward(X, params):
    B, L, O, D = X.shape
    H = params["w_hh"].shape[1]
    x = jnp.reshape(X, (B * O, L, D))
    N = B * O

    def step(carry, x_t):
        h, c = carry
        gates = (x_t @ params["w_ih"].T + h @ params["w_hh"].T
                 + params["b_ih"] + params["b_hh"])
        i, f, g, o = jnp.split(gates, 4, axis=-1)
        i, f, o = jax.nn.sigmoid(i), jax.nn.sigmoid(f), jax.nn.sigmoid(o)
        g = jnp.tanh(g)
        c = f * c + i * g
        h = o * jnp.tanh(c)
        return (h, c), h

    init = (jnp.zeros((N, H), jnp.float32), jnp.zeros((N, H), jnp.float32))
    _, ys = lax.scan(step, init, jnp.transpose(x, (1, 0, 2)))
    lstm_out = jnp.transpose(ys, (1, 0, 2))                   # (N, L, H)
    y = jnp.reshape(lstm_out, (B, L, O, H))[:, L - 1:L]       # (B, 1, O, H)
    z = y @ params["w_lin"].T + params["b_lin"]
    return jnp.matmul(z, jnp.transpose(y, (0, 1, 3, 2)))      # (B, 1, O, O)


# --------------------------------- main --------------------------------------
if __name__ == "__main__":
    B, L, O = 2, 8, 4
    D = 16   # args.num_tiles  (LSTM input size)
    H = 32   # args.d_model    (LSTM hidden / linear size)

    key = jax.random.PRNGKey(0)
    kx, k0, k1, k2, k3, k4, k5 = jax.random.split(key, 7)
    scale = 1.0 / np.sqrt(H)

    params = {
        "w_ih": jax.random.uniform(k0, (4 * H, D), jnp.float32, -scale, scale),
        "w_hh": jax.random.uniform(k1, (4 * H, H), jnp.float32, -scale, scale),
        "b_ih": jax.random.uniform(k2, (4 * H,), jnp.float32, -scale, scale),
        "b_hh": jax.random.uniform(k3, (4 * H,), jnp.float32, -scale, scale),
        "w_lin": jax.random.uniform(k4, (H, H), jnp.float32, -scale, scale),
        "b_lin": jax.random.uniform(k5, (H,), jnp.float32, -scale, scale),
    }

    X = jax.random.normal(kx, (B, L, O, D), jnp.float32)

    out = jax.block_until_ready(model_forward(X, params))
    ref = jax.block_until_ready(_ref_forward(X, params))

    assert out.shape == (B, 1, O, O), out.shape
    np.testing.assert_allclose(np.asarray(out), np.asarray(ref),
                               rtol=1e-5, atol=1e-5)
    print("KERNEL_OK")
</pallas_src>

<mosaic_0001>
module attributes {stable_mosaic.version = 11 : i64} {
  func.func @kernel(%arg0: memref<64x16xf32, #tpu.memory_space<vmem>>, %arg1: memref<82x128xf32, #tpu.memory_space<vmem>>, %arg2: memref<8x4xf32, #tpu.memory_space<vmem>>) attributes {dimension_semantics = [], scalar_prefetch = 0 : i64, scratch_operands = 0 : i64, tpu.core_type = #tpu.core_type<tc>} {
    %c0 = arith.constant 0 : index
    %c0_0 = arith.constant 0 : index
    %0 = vector.load %arg1[%c0, %c0_0] : memref<82x128xf32, #tpu.memory_space<vmem>>, vector<16x128xf32>
    %c16 = arith.constant 16 : index
    %c0_1 = arith.constant 0 : index
    %1 = vector.load %arg1[%c16, %c0_1] : memref<82x128xf32, #tpu.memory_space<vmem>>, vector<32x128xf32>
    %c48 = arith.constant 48 : index
    %c0_2 = arith.constant 0 : index
    %2 = vector.load %arg1[%c48, %c0_2] : memref<82x128xf32, #tpu.memory_space<vmem>>, vector<32x128xf32>
    %c80 = arith.constant 80 : index
    %c0_3 = arith.constant 0 : index
    %3 = vector.load %arg1[%c80, %c0_3] : memref<82x128xf32, #tpu.memory_space<vmem>>, vector<1x128xf32>
    %c81 = arith.constant 81 : index
    %c0_4 = arith.constant 0 : index
    %4 = vector.load %arg1[%c81, %c0_4] : memref<82x128xf32, #tpu.memory_space<vmem>>, vector<1x128xf32>
    %c0_5 = arith.constant 0 : index
    %c0_6 = arith.constant 0 : index
    %5 = vector.load %arg0[%c0_5, %c0_6] : memref<64x16xf32, #tpu.memory_space<vmem>>, vector<64x16xf32>
    %cst = arith.constant dense<0.000000e+00> : vector<64x128xf32>
    %6 = tpu.matmul %5, %0, %cst {dimension_numbers = #tpu.dot_dimension_numbers<[1], [0], [0], [1], [0, 0, 1, 1], [], []>} : vector<64x16xf32>, vector<16x128xf32>, vector<64x128xf32> -> vector<64x128xf32>
    %7 = vector.broadcast %3 : vector<1x128xf32> to vector<64x128xf32>
    %8 = arith.addf %6, %7 : vector<64x128xf32>
    %cst_7 = arith.constant 0.000000e+00 : f32
    %9 = vector.broadcast %cst_7 : f32 to vector<8x32xf32>
    %cst_8 = arith.constant 0.000000e+00 : f32
    %10 = vector.broadcast %cst_8 : f32 to vector<8x32xf32>
    %11 = vector.extract_strided_slice %8 {offsets = [0, 0], sizes = [8, 128], strides = [1, 1]} : vector<64x128xf32> to vector<8x128xf32>
    %cst_9 = arith.constant dense<0.000000e+00> : vector<8x128xf32>
    %12 = tpu.matmul %9, %1, %cst_9 {dimension_numbers = #tpu.dot_dimension_numbers<[1], [0], [0], [1], [0, 0, 1, 1], [], []>} : vector<8x32xf32>, vector<32x128xf32>, vector<8x128xf32> -> vector<8x128xf32>
    %13 = arith.addf %11, %12 : vector<8x128xf32>
    %14 = arith.negf %13 : vector<8x128xf32>
    %15 = math.exp %14 : vector<8x128xf32>
    %cst_10 = arith.constant 1.000000e+00 : f32
    %16 = vector.broadcast %cst_10 : f32 to vector<8x128xf32>
    %17 = arith.addf %16, %15 : vector<8x128xf32>
    %18 = arith.divf %16, %17 : vector<8x128xf32>
    %19 = vector.extract_strided_slice %18 {offsets = [0, 0], sizes = [8, 32], strides = [1, 1]} : vector<8x128xf32> to vector<8x32xf32>
    %20 = vector.extract_strided_slice %18 {offsets = [0, 32], sizes = [8, 32], strides = [1, 1]} : vector<8x128xf32> to vector<8x32xf32>
    %21 = vector.extract_strided_slice %18 {offsets = [0, 96], sizes = [8, 32], strides = [1, 1]} : vector<8x128xf32> to vector<8x32xf32>
    %22 = vector.extract_strided_slice %13 {offsets = [0, 64], sizes = [8, 32], strides = [1, 1]} : vector<8x128xf32> to vector<8x32xf32>
    %23 = math.tanh %22 : vector<8x32xf32>
    %24 = arith.mulf %20, %10 : vector<8x32xf32>
    %25 = arith.mulf %19, %23 : vector<8x32xf32>
    %26 = arith.addf %24, %25 : vector<8x32xf32>
    %27 = math.tanh %26 : vector<8x32xf32>
    %28 = arith.mulf %21, %27 : vector<8x32xf32>
    %29 = vector.extract_strided_slice %8 {offsets = [8, 0], sizes = [8, 128], strides = [1, 1]} : vector<64x128xf32> to vector<8x128xf32>
    %cst_11 = arith.constant dense<0.000000e+00> : vector<8x128xf32>
    %30 = tpu.matmul %28, %1, %cst_11 {dimension_numbers = #tpu.dot_dimension_numbers<[1], [0], [0], [1], [0, 0, 1, 1], [], []>} : vector<8x32xf32>, vector<32x128xf32>, vector<8x128xf32> -> vector<8x128xf32>
    %31 = arith.addf %29, %30 : vector<8x128xf32>
    %32 = arith.negf %31 : vector<8x128xf32>
    %33 = math.exp %32 : vector<8x128xf32>
    %cst_12 = arith.constant 1.000000e+00 : f32
    %34 = vector.broadcast %cst_12 : f32 to vector<8x128xf32>
    %35 = arith.addf %34, %33 : vector<8x128xf32>
    %36 = arith.divf %34, %35 : vector<8x128xf32>
    %37 = vector.extract_strided_slice %36 {offsets = [0, 0], sizes = [8, 32], strides = [1, 1]} : vector<8x128xf32> to vector<8x32xf32>
    %38 = vector.extract_strided_slice %36 {offsets = [0, 32], sizes = [8, 32], strides = [1, 1]} : vector<8x128xf32> to vector<8x32xf32>
    %39 = vector.extract_strided_slice %36 {offsets = [0, 96], sizes = [8, 32], strides = [1, 1]} : vector<8x128xf32> to vector<8x32xf32>
    %40 = vector.extract_strided_slice %31 {offsets = [0, 64], sizes = [8, 32], strides = [1, 1]} : vector<8x128xf32> to vector<8x32xf32>
    %41 = math.tanh %40 : vector<8x32xf32>
    %42 = arith.mulf %38, %26 : vector<8x32xf32>
    %43 = arith.mulf %37, %41 : vector<8x32xf32>
    %44 = arith.addf %42, %43 : vector<8x32xf32>
    %45 = math.tanh %44 : vector<8x32xf32>
    %46 = arith.mulf %39, %45 : vector<8x32xf32>
    %47 = vector.extract_strided_slice %8 {offsets = [16, 0], sizes = [8, 128], strides = [1, 1]} : vector<64x128xf32> to vector<8x128xf32>
    %cst_13 = arith.constant dense<0.000000e+00> : vector<8x128xf32>
    %48 = tpu.matmul %46, %1, %cst_13 {dimension_numbers = #tpu.dot_dimension_numbers<[1], [0], [0], [1], [0, 0, 1, 1], [], []>} : vector<8x32xf32>, vector<32x128xf32>, vector<8x128xf32> -> vector<8x128xf32>
    %49 = arith.addf %47, %48 : vector<8x128xf32>
    %50 = arith.negf %49 : vector<8x128xf32>
    %51 = math.exp %50 : vector<8x128xf32>
    %cst_14 = arith.constant 1.000000e+00 : f32
    %52 = vector.broadcast %cst_14 : f32 to vector<8x128xf32>
    %53 = arith.addf %52, %51 : vector<8x128xf32>
    %54 = arith.divf %52, %53 : vector<8x128xf32>
    %55 = vector.extract_strided_slice %54 {offsets = [0, 0], sizes = [8, 32], strides = [1, 1]} : vector<8x128xf32> to vector<8x32xf32>
    %56 = vector.extract_strided_slice %54 {offsets = [0, 32], sizes = [8, 32], strides = [1, 1]} : vector<8x128xf32> to vector<8x32xf32>
    %57 = vector.extract_strided_slice %54 {offsets = [0, 96], sizes = [8, 32], strides = [1, 1]} : vector<8x128xf32> to vector<8x32xf32>
    %58 = vector.extract_strided_slice %49 {offsets = [0, 64], sizes = [8, 32], strides = [1, 1]} : vector<8x128xf32> to vector<8x32xf32>
    %59 = math.tanh %58 : vector<8x32xf32>
    %60 = arith.mulf %56, %44 : vector<8x32xf32>
    %61 = arith.mulf %55, %59 : vector<8x32xf32>
    %62 = arith.addf %60, %61 : vector<8x32xf32>
    %63 = math.tanh %62 : vector<8x32xf32>
    %64 = arith.mulf %57, %63 : vector<8x32xf32>
    %65 = vector.extract_strided_slice %8 {offsets = [24, 0], sizes = [8, 128], strides = [1, 1]} : vector<64x128xf32> to vector<8x128xf32>
    %cst_15 = arith.constant dense<0.000000e+00> : vector<8x128xf32>
    %66 = tpu.matmul %64, %1, %cst_15 {dimension_numbers = #tpu.dot_dimension_numbers<[1], [0], [0], [1], [0, 0, 1, 1], [], []>} : vector<8x32xf32>, vector<32x128xf32>, vector<8x128xf32> -> vector<8x128xf32>
    %67 = arith.addf %65, %66 : vector<8x128xf32>
    %68 = arith.negf %67 : vector<8x128xf32>
    %69 = math.exp %68 : vector<8x128xf32>
    %cst_16 = arith.constant 1.000000e+00 : f32
    %70 = vector.broadcast %cst_16 : f32 to vector<8x128xf32>
    %71 = arith.addf %70, %69 : vector<8x128xf32>
    %72 = arith.divf %70, %71 : vector<8x128xf32>
    %73 = vector.extract_strided_slice %72 {offsets = [0, 0], sizes = [8, 32], strides = [1, 1]} : vector<8x128xf32> to vector<8x32xf32>
    %74 = vector.extract_strided_slice %72 {offsets = [0, 32], sizes = [8, 32], strides = [1, 1]} : vector<8x128xf32> to vector<8x32xf32>
    %75 = vector.extract_strided_slice %72 {offsets = [0, 96], sizes = [8, 32], strides = [1, 1]} : vector<8x128xf32> to vector<8x32xf32>
    %76 = vector.extract_strided_slice %67 {offsets = [0, 64], sizes = [8, 32], strides = [1, 1]} : vector<8x128xf32> to vector<8x32xf32>
    %77 = math.tanh %76 : vector<8x32xf32>
    %78 = arith.mulf %74, %62 : vector<8x32xf32>
    %79 = arith.mulf %73, %77 : vector<8x32xf32>
    %80 = arith.addf %78, %79 : vector<8x32xf32>
    %81 = math.tanh %80 : vector<8x32xf32>
    %82 = arith.mulf %75, %81 : vector<8x32xf32>
    %83 = vector.extract_strided_slice %8 {offsets = [32, 0], sizes = [8, 128], strides = [1, 1]} : vector<64x128xf32> to vector<8x128xf32>
    %cst_17 = arith.constant dense<0.000000e+00> : vector<8x128xf32>
    %84 = tpu.matmul %82, %1, %cst_17 {dimension_numbers = #tpu.dot_dimension_numbers<[1], [0], [0], [1], [0, 0, 1, 1], [], []>} : vector<8x32xf32>, vector<32x128xf32>, vector<8x128xf32> -> vector<8x128xf32>
    %85 = arith.addf %83, %84 : vector<8x128xf32>
    %86 = arith.negf %85 : vector<8x128xf32>
    %87 = math.exp %86 : vector<8x128xf32>
    %cst_18 = arith.constant 1.000000e+00 : f32
    %88 = vector.broadcast %cst_18 : f32 to vector<8x128xf32>
    %89 = arith.addf %88, %87 : vector<8x128xf32>
    %90 = arith.divf %88, %89 : vector<8x128xf32>
    %91 = vector.extract_strided_slice %90 {offsets = [0, 0], sizes = [8, 32], strides = [1, 1]} : vector<8x128xf32> to vector<8x32xf32>
    %92 = vector.extract_strided_slice %90 {offsets = [0, 32], sizes = [8, 32], strides = [1, 1]} : vector<8x128xf32> to vector<8x32xf32>
    %93 = vector.extract_strided_slice %90 {offsets = [0, 96], sizes = [8, 32], strides = [1, 1]} : vector<8x128xf32> to vector<8x32xf32>
    %94 = vector.extract_strided_slice %85 {offsets = [0, 64], sizes = [8, 32], strides = [1, 1]} : vector<8x128xf32> to vector<8x32xf32>
    %95 = math.tanh %94 : vector<8x32xf32>
    %96 = arith.mulf %92, %80 : vector<8x32xf32>
    %97 = arith.mulf %91, %95 : vector<8x32xf32>
    %98 = arith.addf %96, %97 : vector<8x32xf32>
    %99 = math.tanh %98 : vector<8x32xf32>
    %100 = arith.mulf %93, %99 : vector<8x32xf32>
    %101 = vector.extract_strided_slice %8 {offsets = [40, 0], sizes = [8, 128], strides = [1, 1]} : vector<64x128xf32> to vector<8x128xf32>
    %cst_19 = arith.constant dense<0.000000e+00> : vector<8x128xf32>
    %102 = tpu.matmul %100, %1, %cst_19 {dimension_numbers = #tpu.dot_dimension_numbers<[1], [0], [0], [1], [0, 0, 1, 1], [], []>} : vector<8x32xf32>, vector<32x128xf32>, vector<8x128xf32> -> vector<8x128xf32>
    %103 = arith.addf %101, %102 : vector<8x128xf32>
    %104 = arith.negf %103 : vector<8x128xf32>
    %105 = math.exp %104 : vector<8x128xf32>
    %cst_20 = arith.constant 1.000000e+00 : f32
    %106 = vector.broadcast %cst_20 : f32 to vector<8x128xf32>
    %107 = arith.addf %106, %105 : vector<8x128xf32>
    %108 = arith.divf %106, %107 : vector<8x128xf32>
    %109 = vector.extract_strided_slice %108 {offsets = [0, 0], sizes = [8, 32], strides = [1, 1]} : vector<8x128xf32> to vector<8x32xf32>
    %110 = vector.extract_strided_slice %108 {offsets = [0, 32], sizes = [8, 32], strides = [1, 1]} : vector<8x128xf32> to vector<8x32xf32>
    %111 = vector.extract_strided_slice %108 {offsets = [0, 96], sizes = [8, 32], strides = [1, 1]} : vector<8x128xf32> to vector<8x32xf32>
    %112 = vector.extract_strided_slice %103 {offsets = [0, 64], sizes = [8, 32], strides = [1, 1]} : vector<8x128xf32> to vector<8x32xf32>
    %113 = math.tanh %112 : vector<8x32xf32>
    %114 = arith.mulf %110, %98 : vector<8x32xf32>
    %115 = arith.mulf %109, %113 : vector<8x32xf32>
    %116 = arith.addf %114, %115 : vector<8x32xf32>
    %117 = math.tanh %116 : vector<8x32xf32>
    %118 = arith.mulf %111, %117 : vector<8x32xf32>
    %119 = vector.extract_strided_slice %8 {offsets = [48, 0], sizes = [8, 128], strides = [1, 1]} : vector<64x128xf32> to vector<8x128xf32>
    %cst_21 = arith.constant dense<0.000000e+00> : vector<8x128xf32>
    %120 = tpu.matmul %118, %1, %cst_21 {dimension_numbers = #tpu.dot_dimension_numbers<[1], [0], [0], [1], [0, 0, 1, 1], [], []>} : vector<8x32xf32>, vector<32x128xf32>, vector<8x128xf32> -> vector<8x128xf32>
    %121 = arith.addf %119, %120 : vector<8x128xf32>
    %122 = arith.negf %121 : vector<8x128xf32>
    %123 = math.exp %122 : vector<8x128xf32>
    %cst_22 = arith.constant 1.000000e+00 : f32
    %124 = vector.broadcast %cst_22 : f32 to vector<8x128xf32>
    %125 = arith.addf %124, %123 : vector<8x128xf32>
    %126 = arith.divf %124, %125 : vector<8x128xf32>
    %127 = vector.extract_strided_slice %126 {offsets = [0, 0], sizes = [8, 32], strides = [1, 1]} : vector<8x128xf32> to vector<8x32xf32>
    %128 = vector.extract_strided_slice %126 {offsets = [0, 32], sizes = [8, 32], strides = [1, 1]} : vector<8x128xf32> to vector<8x32xf32>
    %129 = vector.extract_strided_slice %126 {offsets = [0, 96], sizes = [8, 32], strides = [1, 1]} : vector<8x128xf32> to vector<8x32xf32>
    %130 = vector.extract_strided_slice %121 {offsets = [0, 64], sizes = [8, 32], strides = [1, 1]} : vector<8x128xf32> to vector<8x32xf32>
    %131 = math.tanh %130 : vector<8x32xf32>
    %132 = arith.mulf %128, %116 : vector<8x32xf32>
    %133 = arith.mulf %127, %131 : vector<8x32xf32>
    %134 = arith.addf %132, %133 : vector<8x32xf32>
    %135 = math.tanh %134 : vector<8x32xf32>
    %136 = arith.mulf %129, %135 : vector<8x32xf32>
    %137 = vector.extract_strided_slice %8 {offsets = [56, 0], sizes = [8, 128], strides = [1, 1]} : vector<64x128xf32> to vector<8x128xf32>
    %cst_23 = arith.constant dense<0.000000e+00> : vector<8x128xf32>
    %138 = tpu.matmul %136, %1, %cst_23 {dimension_numbers = #tpu.dot_dimension_numbers<[1], [0], [0], [1], [0, 0, 1, 1], [], []>} : vector<8x32xf32>, vector<32x128xf32>, vector<8x128xf32> -> vector<8x128xf32>
    %139 = arith.addf %137, %138 : vector<8x128xf32>
    %140 = arith.negf %139 : vector<8x128xf32>
    %141 = math.exp %140 : vector<8x128xf32>
    %cst_24 = arith.constant 1.000000e+00 : f32
    %142 = vector.broadcast %cst_24 : f32 to vector<8x128xf32>
    %143 = arith.addf %142, %141 : vector<8x128xf32>
    %144 = arith.divf %142, %143 : vector<8x128xf32>
    %145 = vector.extract_strided_slice %144 {offsets = [0, 0], sizes = [8, 32], strides = [1, 1]} : vector<8x128xf32> to vector<8x32xf32>
    %146 = vector.extract_strided_slice %144 {offsets = [0, 32], sizes = [8, 32], strides = [1, 1]} : vector<8x128xf32> to vector<8x32xf32>
    %147 = vector.extract_strided_slice %144 {offsets = [0, 96], sizes = [8, 32], strides = [1, 1]} : vector<8x128xf32> to vector<8x32xf32>
    %148 = vector.extract_strided_slice %139 {offsets = [0, 64], sizes = [8, 32], strides = [1, 1]} : vector<8x128xf32> to vector<8x32xf32>
    %149 = math.tanh %148 : vector<8x32xf32>
    %150 = arith.mulf %146, %134 : vector<8x32xf32>
    %151 = arith.mulf %145, %149 : vector<8x32xf32>
    %152 = arith.addf %150, %151 : vector<8x32xf32>
    %153 = math.tanh %152 : vector<8x32xf32>
    %154 = arith.mulf %147, %153 : vector<8x32xf32>
    %155 = vector.extract_strided_slice %100 {offsets = [3, 0], sizes = [1, 32], strides = [1, 1]} : vector<8x32xf32> to vector<1x32xf32>
    %156 = vector.extract_strided_slice %118 {offsets = [3, 0], sizes = [1, 32], strides = [1, 1]} : vector<8x32xf32> to vector<1x32xf32>
    %157 = vector.extract_strided_slice %136 {offsets = [3, 0], sizes = [1, 32], strides = [1, 1]} : vector<8x32xf32> to vector<1x32xf32>
    %158 = vector.extract_strided_slice %154 {offsets = [3, 0], sizes = [1, 32], strides = [1, 1]} : vector<8x32xf32> to vector<1x32xf32>
    %159 = vector.extract_strided_slice %100 {offsets = [7, 0], sizes = [1, 32], strides = [1, 1]} : vector<8x32xf32> to vector<1x32xf32>
    %160 = vector.extract_strided_slice %118 {offsets = [7, 0], sizes = [1, 32], strides = [1, 1]} : vector<8x32xf32> to vector<1x32xf32>
    %161 = vector.extract_strided_slice %136 {offsets = [7, 0], sizes = [1, 32], strides = [1, 1]} : vector<8x32xf32> to vector<1x32xf32>
    %162 = vector.extract_strided_slice %154 {offsets = [7, 0], sizes = [1, 32], strides = [1, 1]} : vector<8x32xf32> to vector<1x32xf32>
    %163 = tpu.concatenate %155, %156, %157, %158, %159, %160, %161, %162 in 0 : vector<1x32xf32>, vector<1x32xf32>, vector<1x32xf32>, vector<1x32xf32>, vector<1x32xf32>, vector<1x32xf32>, vector<1x32xf32>, vector<1x32xf32> -> vector<8x32xf32>
    %cst_25 = arith.constant dense<0.000000e+00> : vector<8x128xf32>
    %164 = tpu.matmul %163, %2, %cst_25 {dimension_numbers = #tpu.dot_dimension_numbers<[1], [0], [0], [1], [0, 0, 1, 1], [], []>} : vector<8x32xf32>, vector<32x128xf32>, vector<8x128xf32> -> vector<8x128xf32>
    %165 = vector.broadcast %4 : vector<1x128xf32> to vector<8x128xf32>
    %166 = arith.addf %164, %165 : vector<8x128xf32>
    %167 = vector.extract_strided_slice %166 {offsets = [0, 0], sizes = [8, 32], strides = [1, 1]} : vector<8x128xf32> to vector<8x32xf32>
    %168 = vector.extract_strided_slice %163 {offsets = [0, 0], sizes = [4, 32], strides = [1, 1]} : vector<8x32xf32> to vector<4x32xf32>
    %169 = vector.extract_strided_slice %167 {offsets = [0, 0], sizes = [4, 32], strides = [1, 1]} : vector<8x32xf32> to vector<4x32xf32>
    %cst_26 = arith.constant dense<0.000000e+00> : vector<4x4xf32>
    %170 = tpu.matmul %169, %168, %cst_26 {dimension_numbers = #tpu.dot_dimension_numbers<[1], [1], [0], [0], [0, 0, 1, 0], [], []>} : vector<4x32xf32>, vector<4x32xf32>, vector<4x4xf32> -> vector<4x4xf32>
    %171 = vector.extract_strided_slice %163 {offsets = [4, 0], sizes = [4, 32], strides = [1, 1]} : vector<8x32xf32> to vector<4x32xf32>
    %172 = vector.extract_strided_slice %167 {offsets = [4, 0], sizes = [4, 32], strides = [1, 1]} : vector<8x32xf32> to vector<4x32xf32>
    %cst_27 = arith.constant dense<0.000000e+00> : vector<4x4xf32>
    %173 = tpu.matmul %172, %171, %cst_27 {dimension_numbers = #tpu.dot_dimension_numbers<[1], [1], [0], [0], [0, 0, 1, 0], [], []>} : vector<4x32xf32>, vector<4x32xf32>, vector<4x4xf32> -> vector<4x4xf32>
    %174 = tpu.concatenate %170, %173 in 0 : vector<4x4xf32>, vector<4x4xf32> -> vector<8x4xf32>
    %c0_28 = arith.constant 0 : index
    %c0_29 = arith.constant 0 : index
    %175 = vector.load %arg2[%c0_28, %c0_29] : memref<8x4xf32, #tpu.memory_space<vmem>>, vector<8x4xf32>
    tpu.vector_store %arg2[%c0_28, %c0_29], %174 {strides = array<i32>} : memref<8x4xf32, #tpu.memory_space<vmem>>, vector<8x4xf32>,
    return
  }
}

</mosaic_0001>

<llo_original>
// kernel: model_forward.1
$region0: #{model_forward.1}
  #allocation0 [shape = 'u32[]', space=smem, size = 0x4, offset = 0x4, fixed_abs, tag = 'smem constant byte address 0x4 - core index']
  #allocation1 [shape = 'u32[72,128]{1,0:T(1,128)}', space=vmem, size = 0x9000, scoped, tag = 'internal scratch']
  %s0 = inlined_call_operand.vmem [shape: f32[64,16], index: 0, kind: input, shape index: {}]
  %s1 = inlined_call_operand.vmem [shape: f32[82,128], index: 1, kind: input, shape index: {}]
  %s2 = inlined_call_operand.hbm [shape: f32[8,4], index: 2, kind: output, shape index: {}]
  %s3 = sld [smem:[#allocation0]]
  $region18: #{model_forward.1} parent=0
    _
  %s5 = ssub.s32 1, %s3
  %s6 = scalar_select 0, %s5, %s3
  $region1: #{model_forward.1} parent=0
    #allocation2 [shape = 'u8[4096]{0}', space=vmem, size = 0x1000, scoped, tag = 'output window, operand 0, single buffered']
    #allocation3 [shape = 's32[1]{0}', space=sflag, size = 0x4, scoped, tag = 'scoped memory for model_forward.1']
    %7 = vsyncpa [#allocation3], 0
    // Predicated region
    $region2: #{model_forward.1} parent=1 // pred_check
      _
    $region3: #{model_forward.1} parent=1 // pred_check_branch
      %9 = sbr.rel (0) target = $region5
    $region4: #{model_forward.1} parent=1 // pred_region
      _
    $region5: #{model_forward.1} parent=1 // pred_fallthru
      _
    // Predicated region
    $region6: #{model_forward.1} parent=1 // pred_check
      _
    $region7: #{model_forward.1} parent=1 // pred_check_branch
      %11 = sbr.rel (0) target = $region9
    $region8: #{model_forward.1} parent=1 // pred_region
      _
    $region9: #{model_forward.1} parent=1 // pred_fallthru
      _
    %v12 = vld [vmem:[%s1] sm:$0xff]
    %v13 = vld [vmem:[%s1 + $0x8] sm:$0xff]
    %v14 = vld [vmem:[%s1 + $0x10] sm:$0xff]
    %v15 = vld [vmem:[%s1 + $0x18] sm:$0xff]
    %v16 = vld [vmem:[%s1 + $0x20] sm:$0xff]
    %v17 = vld [vmem:[%s1 + $0x28] sm:$0xff]
    %v18 = vld [vmem:[%s1 + $0x30] sm:$0xff]
    %v19 = vld [vmem:[%s1 + $0x38] sm:$0xff]
    %v20 = vld [vmem:[%s1 + $0x40] sm:$0xff]
    %v21 = vld [vmem:[%s1 + $0x48] sm:$0xff]
    %v22 = vld [vmem:[%s1 + $0x50] sm:$0x1]
    %v23 = vld [vmem:[%s1 + $0x51] sm:$0x1]
    %v24 = vld [vmem:[%s0] sm:$0xff]
    %v25 = vld [vmem:[%s0 + $0x8] sm:$0xff]
    %v26 = vld [vmem:[%s0 + $0x10] sm:$0xff]
    %v27 = vld [vmem:[%s0 + $0x18] sm:$0xff]
    %v28 = vld [vmem:[%s0 + $0x20] sm:$0xff]
    %v29 = vld [vmem:[%s0 + $0x28] sm:$0xff]
    %v30 = vld [vmem:[%s0 + $0x30] sm:$0xff]
    %v31 = vld [vmem:[%s0 + $0x38] sm:$0xff]
    %v32 = vperm.slane %v22, 0
    %vm33 = vcmask 130048
    %v35 = vsel %vm33, %v24, 0
    %v38 = vsel %vm33, %v25, 0
    %v41 = vsel %vm33, %v26, 0
    %v44 = vsel %vm33, %v27, 0
    %v47 = vsel %vm33, %v28, 0
    %v50 = vsel %vm33, %v29, 0
    %v53 = vsel %vm33, %v30, 0
    %v56 = vsel %vm33, %v31, 0
    %58 = vmatpush.msra.mxu0 0.0
    %59 = vmatpush.msra.mxu0 0.0
    %60 = vmatpush.msra.mxu0 0.0
    %61 = vmatpush.msra.mxu0 0.0
    %62 = vmatpush.msra.mxu0 0.0
    %63 = vmatpush.msra.mxu0 0.0
    %64 = vmatpush.msra.mxu0 0.0
    %65 = vmatpush.msra.mxu0 0.0
    %66 = vmatpush.msra.mxu0 0.0
    %67 = vmatpush.msra.mxu0 0.0
    %68 = vmatpush.msra.mxu0 0.0
    %69 = vmatpush.msra.mxu0 0.0
    %70 = vmatpush.msra.mxu0 0.0
    %71 = vmatpush.msra.mxu0 0.0
    %72 = vmatpush.msra.mxu0 %v13
    %73 = vmatpush.msra.mxu0 %v12
    %74 = vmatmul.f32.gmra.mxu0 %v35
    %v75 = vpop.f32.mrf.mxu0
    %v76 = vadd.f32 %v32, %v75
    %77 = vmatmul.f32.gmra.mxu0 %v38
    %v78 = vpop.f32.mrf.mxu0
    %v79 = vadd.f32 %v32, %v78
    %80 = vmatmul.f32.gmra.mxu0 %v41
    %v81 = vpop.f32.mrf.mxu0
    %v82 = vadd.f32 %v32, %v81
    %83 = vmatmul.f32.gmra.mxu0 %v44
    %v84 = vpop.f32.mrf.mxu0
    %v85 = vadd.f32 %v32, %v84
    %86 = vmatmul.f32.gmra.mxu0 %v47
    %v87 = vpop.f32.mrf.mxu0
    %v88 = vadd.f32 %v32, %v87
    %89 = vmatmul.f32.gmra.mxu0 %v50
    %v90 = vpop.f32.mrf.mxu0
    %v91 = vadd.f32 %v32, %v90
    %92 = vmatmul.f32.gmra.mxu0 %v53
    %v93 = vpop.f32.mrf.mxu0
    %v94 = vadd.f32 %v32, %v93
    %95 = vmatmul.f32.gmra.mxu0 %v56
    %v96 = vpop.f32.mrf.mxu0
    %v97 = vadd.f32 %v32, %v96
    %98 = vdwg.mxu0
    %vm99 = vcmask 261120
    %v101 = vsel %vm99, 0.0, 0
    %103 = vmatpush.msra.mxu0 0.0
    %104 = vmatpush.msra.mxu0 0.0
    %105 = vmatpush.msra.mxu0 0.0
    %106 = vmatpush.msra.mxu0 0.0
    %107 = vmatpush.msra.mxu0 0.0
    %108 = vmatpush.msra.mxu0 0.0
    %109 = vmatpush.msra.mxu0 0.0
    %110 = vmatpush.msra.mxu0 0.0
    %111 = vmatpush.msra.mxu0 0.0
    %112 = vmatpush.msra.mxu0 0.0
    %113 = vmatpush.msra.mxu0 0.0
    %114 = vmatpush.msra.mxu0 0.0
    %115 = vmatpush.msra.mxu0 %v17
    %116 = vmatpush.msra.mxu0 %v16
    %117 = vmatpush.msra.mxu0 %v15
    %118 = vmatpush.msra.mxu0 %v14
    %119 = vmatmul.f32.gmra.mxu0 %v101
    %v120 = vpop.f32.mrf.mxu0
    %v121 = vadd.f32 0.0, %v120
    %122 = vdwg.mxu0
    %v123 = vadd.f32 %v76, %v121
    %v124 = vxor.u32 %v123, 2147483648
    %v125 = vmul.f32 %v124, 1.442695
    %v126 = vpow.pop %v125
    %v127 = vadd.f32 %v126, 1.0
    %v128 = vrcp.pop %v127
    %v129 = vmul.f32 %v127, %v128
    %v130 = vsub.f32 1.0, %v129
    %v131 = vmul.f32 %v128, %v130
    %v132 = vadd.f32 %v128, %v131
    %vm133 = vweird.f32 %v127
    %vm134 = vweird.f32 %v128
    %vm135 = vmor %vm133, %vm134
    %v136 = vsel %vm135, %v128, %v132
    %v137 = vand.u32 2147483647, %v127
    %vm138 = vcmp.eq.f32.partialorder %v137, 8.507059e+37
    %v139 = vand.u32 %v127, 2147483648
    %v140 = vor.u32 1.1754944e-38, %v139
    %v141 = vsel %vm138, %v140, %v136
    %v142 = vmul.f32 1.0, %v141
    %v143 = vtanh.pop %v123
    %v144 = vmul.f32 %v142, 0.0
    %146 = vrot.lane.b32.xlu0 %v143, 64
    %v147 = vpop.permute.xlu0 %146
    %v149 = vmul.f32 %v142, %v147
    %151 = vrot.lane.b32.xlu0 %v149, 32
    %v152 = vpop.permute.xlu0 %151
    %v154 = vadd.f32 %v144, %v152
    %v155 = vtanh.pop %v154
    %157 = vrot.lane.b32.xlu0 %v155, 64
    %v158 = vpop.permute.xlu0 %157
    %v160 = vmul.f32 %v142, %v158
    %162 = vrot.lane.b32.xlu0 %v160, 32
    %v163 = vpop.permute.xlu0 %162
    %v164 = vsel %vm99, %v163, 0
    %166 = vmatpush.msra.mxu0 0.0
    %167 = vmatpush.msra.mxu0 0.0
    %168 = vmatpush.msra.mxu0 0.0
    %169 = vmatpush.msra.mxu0 0.0
    %170 = vmatpush.msra.mxu0 0.0
    %171 = vmatpush.msra.mxu0 0.0
    %172 = vmatpush.msra.mxu0 0.0
    %173 = vmatpush.msra.mxu0 0.0
    %174 = vmatpush.msra.mxu0 0.0
    %175 = vmatpush.msra.mxu0 0.0
    %176 = vmatpush.msra.mxu0 0.0
    %177 = vmatpush.msra.mxu0 0.0
    %178 = vmatpush.msra.mxu0 %v17
    %179 = vmatpush.msra.mxu0 %v16
    %180 = vmatpush.msra.mxu0 %v15
    %181 = vmatpush.msra.mxu0 %v14
    %182 = vmatmul.f32.gmra.mxu0 %v164
    %v183 = vpop.f32.mrf.mxu0
    %v184 = vadd.f32 0.0, %v183
    %185 = vdwg.mxu0
    %v186 = vadd.f32 %v79, %v184
    %v187 = vxor.u32 %v186, 2147483648
    %v188 = vmul.f32 %v187, 1.442695
    %v189 = vpow.pop %v188
    %v190 = vadd.f32 %v189, 1.0
    %v191 = vrcp.pop %v190
    %v192 = vmul.f32 %v190, %v191
    %v193 = vsub.f32 1.0, %v192
    %v194 = vmul.f32 %v191, %v193
    %v195 = vadd.f32 %v191, %v194
    %vm196 = vweird.f32 %v190
    %vm197 = vweird.f32 %v191
    %vm198 = vmor %vm196, %vm197
    %v199 = vsel %vm198, %v191, %v195
    %v200 = vand.u32 2147483647, %v190
    %vm201 = vcmp.eq.f32.partialorder %v200, 8.507059e+37
    %v202 = vand.u32 %v190, 2147483648
    %v203 = vor.u32 1.1754944e-38, %v202
    %v204 = vsel %vm201, %v203, %v199
    %v205 = vmul.f32 1.0, %v204
    %v206 = vtanh.pop %v186
    %v207 = vmul.f32 %v205, %v154
    %209 = vrot.lane.b32.xlu0 %v206, 64
    %v210 = vpop.permute.xlu0 %209
    %v212 = vmul.f32 %v205, %v210
    %214 = vrot.lane.b32.xlu0 %v212, 32
    %v215 = vpop.permute.xlu0 %214
    %v217 = vadd.f32 %v207, %v215
    %v218 = vtanh.pop %v217
    %220 = vrot.lane.b32.xlu0 %v218, 64
    %v221 = vpop.permute.xlu0 %220
    %v223 = vmul.f32 %v205, %v221
    %225 = vrot.lane.b32.xlu0 %v223, 32
    %v226 = vpop.permute.xlu0 %225
    %v227 = vsel %vm99, %v226, 0
    %229 = vmatpush.msra.mxu0 0.0
    %230 = vmatpush.msra.mxu0 0.0
    %231 = vmatpush.msra.mxu0 0.0
    %232 = vmatpush.msra.mxu0 0.0
    %233 = vmatpush.msra.mxu0 0.0
    %234 = vmatpush.msra.mxu0 0.0
    %235 = vmatpush.msra.mxu0 0.0
    %236 = vmatpush.msra.mxu0 0.0
    %237 = vmatpush.msra.mxu0 0.0
    %238 = vmatpush.msra.mxu0 0.0
    %239 = vmatpush.msra.mxu0 0.0
    %240 = vmatpush.msra.mxu0 0.0
    %241 = vmatpush.msra.mxu0 %v17
    %242 = vmatpush.msra.mxu0 %v16
    %243 = vmatpush.msra.mxu0 %v15
    %244 = vmatpush.msra.mxu0 %v14
    %245 = vmatmul.f32.gmra.mxu0 %v227
    %v246 = vpop.f32.mrf.mxu0
    %v247 = vadd.f32 0.0, %v246
    %248 = vdwg.mxu0
    %v249 = vadd.f32 %v82, %v247
    %v250 = vxor.u32 %v249, 2147483648
    %v251 = vmul.f32 %v250, 1.442695
    %v252 = vpow.pop %v251
    %v253 = vadd.f32 %v252, 1.0
    %v254 = vrcp.pop %v253
    %v255 = vmul.f32 %v253, %v254
    %v256 = vsub.f32 1.0, %v255
    %v257 = vmul.f32 %v254, %v256
    %v258 = vadd.f32 %v254, %v257
    %vm259 = vweird.f32 %v253
    %vm260 = vweird.f32 %v254
    %vm261 = vmor %vm259, %vm260
    %v262 = vsel %vm261, %v254, %v258
    %v263 = vand.u32 2147483647, %v253
    %vm264 = vcmp.eq.f32.partialorder %v263, 8.507059e+37
    %v265 = vand.u32 %v253, 2147483648
    %v266 = vor.u32 1.1754944e-38, %v265
    %v267 = vsel %vm264, %v266, %v262
    %v268 = vmul.f32 1.0, %v267
    %v269 = vtanh.pop %v249
    %v270 = vmul.f32 %v268, %v217
    %272 = vrot.lane.b32.xlu0 %v269, 64
    %v273 = vpop.permute.xlu0 %272
    %v275 = vmul.f32 %v268, %v273
    %277 = vrot.lane.b32.xlu0 %v275, 32
    %v278 = vpop.permute.xlu0 %277
    %v280 = vadd.f32 %v270, %v278
    %v281 = vtanh.pop %v280
    %283 = vrot.lane.b32.xlu0 %v281, 64
    %v284 = vpop.permute.xlu0 %283
    %v286 = vmul.f32 %v268, %v284
    %288 = vrot.lane.b32.xlu0 %v286, 32
    %v289 = vpop.permute.xlu0 %288
    %v290 = vsel %vm99, %v289, 0
    %292 = vmatpush.msra.mxu0 0.0
    %293 = vmatpush.msra.mxu0 0.0
    %294 = vmatpush.msra.mxu0 0.0
    %295 = vmatpush.msra.mxu0 0.0
    %296 = vmatpush.msra.mxu0 0.0
    %297 = vmatpush.msra.mxu0 0.0
    %298 = vmatpush.msra.mxu0 0.0
    %299 = vmatpush.msra.mxu0 0.0
    %300 = vmatpush.msra.mxu0 0.0
    %301 = vmatpush.msra.mxu0 0.0
    %302 = vmatpush.msra.mxu0 0.0
    %303 = vmatpush.msra.mxu0 0.0
    %304 = vmatpush.msra.mxu0 %v17
    %305 = vmatpush.msra.mxu0 %v16
    %306 = vmatpush.msra.mxu0 %v15
    %307 = vmatpush.msra.mxu0 %v14
    %308 = vmatmul.f32.gmra.mxu0 %v290
    %v309 = vpop.f32.mrf.mxu0
    %v310 = vadd.f32 0.0, %v309
    %311 = vdwg.mxu0
    %v312 = vadd.f32 %v85, %v310
    %v313 = vxor.u32 %v312, 2147483648
    %v314 = vmul.f32 %v313, 1.442695
    %v315 = vpow.pop %v314
    %v316 = vadd.f32 %v315, 1.0
    %v317 = vrcp.pop %v316
    %v318 = vmul.f32 %v316, %v317
    %v319 = vsub.f32 1.0, %v318
    %v320 = vmul.f32 %v317, %v319
    %v321 = vadd.f32 %v317, %v320
    %vm322 = vweird.f32 %v316
    %vm323 = vweird.f32 %v317
    %vm324 = vmor %vm322, %vm323
    %v325 = vsel %vm324, %v317, %v321
    %v326 = vand.u32 2147483647, %v316
    %vm327 = vcmp.eq.f32.partialorder %v326, 8.507059e+37
    %v328 = vand.u32 %v316, 2147483648
    %v329 = vor.u32 1.1754944e-38, %v328
    %v330 = vsel %vm327, %v329, %v325
    %v331 = vmul.f32 1.0, %v330
    %v332 = vtanh.pop %v312
    %v333 = vmul.f32 %v331, %v280
    %335 = vrot.lane.b32.xlu0 %v332, 64
    %v336 = vpop.permute.xlu0 %335
    %v338 = vmul.f32 %v331, %v336
    %340 = vrot.lane.b32.xlu0 %v338, 32
    %v341 = vpop.permute.xlu0 %340
    %v343 = vadd.f32 %v333, %v341
    %v344 = vtanh.pop %v343
    %346 = vrot.lane.b32.xlu0 %v344, 64
    %v347 = vpop.permute.xlu0 %346
    %v349 = vmul.f32 %v331, %v347
    %351 = vrot.lane.b32.xlu0 %v349, 32
    %v352 = vpop.permute.xlu0 %351
    %v353 = vsel %vm99, %v352, 0
    %355 = vmatpush.msra.mxu0 0.0
    %356 = vmatpush.msra.mxu0 0.0
    %357 = vmatpush.msra.mxu0 0.0
    %358 = vmatpush.msra.mxu0 0.0
    %359 = vmatpush.msra.mxu0 0.0
    %360 = vmatpush.msra.mxu0 0.0
    %361 = vmatpush.msra.mxu0 0.0
    %362 = vmatpush.msra.mxu0 0.0
    %363 = vmatpush.msra.mxu0 0.0
    %364 = vmatpush.msra.mxu0 0.0
    %365 = vmatpush.msra.mxu0 0.0
    %366 = vmatpush.msra.mxu0 0.0
    %367 = vmatpush.msra.mxu0 %v17
    %368 = vmatpush.msra.mxu0 %v16
    %369 = vmatpush.msra.mxu0 %v15
    %370 = vmatpush.msra.mxu0 %v14
    %371 = vmatmul.f32.gmra.mxu0 %v353
    %v372 = vpop.f32.mrf.mxu0
    %v373 = vadd.f32 0.0, %v372
    %374 = vdwg.mxu0
    %v375 = vadd.f32 %v88, %v373
    %v376 = vxor.u32 %v375, 2147483648
    %v377 = vmul.f32 %v376, 1.442695
    %v378 = vpow.pop %v377
    %v379 = vadd.f32 %v378, 1.0
    %v380 = vrcp.pop %v379
    %v381 = vmul.f32 %v379, %v380
    %v382 = vsub.f32 1.0, %v381
    %v383 = vmul.f32 %v380, %v382
    %v384 = vadd.f32 %v380, %v383
    %vm385 = vweird.f32 %v379
    %vm386 = vweird.f32 %v380
    %vm387 = vmor %vm385, %vm386
    %v388 = vsel %vm387, %v380, %v384
    %v389 = vand.u32 2147483647, %v379
    %vm390 = vcmp.eq.f32.partialorder %v389, 8.507059e+37
    %v391 = vand.u32 %v379, 2147483648
    %v392 = vor.u32 1.1754944e-38, %v391
    %v393 = vsel %vm390, %v392, %v388
    %v394 = vmul.f32 1.0, %v393
    %v395 = vtanh.pop %v375
    %v396 = vmul.f32 %v394, %v343
    %398 = vrot.lane.b32.xlu0 %v395, 64
    %v399 = vpop.permute.xlu0 %398
    %v401 = vmul.f32 %v394, %v399
    %403 = vrot.lane.b32.xlu0 %v401, 32
    %v404 = vpop.permute.xlu0 %403
    %v406 = vadd.f32 %v396, %v404
    %v407 = vtanh.pop %v406
    %409 = vrot.lane.b32.xlu0 %v407, 64
    %v410 = vpop.permute.xlu0 %409
    %v412 = vmul.f32 %v394, %v410
    %414 = vrot.lane.b32.xlu0 %v412, 32
    %v415 = vpop.permute.xlu0 %414
    %v416 = vsel %vm99, %v415, 0
    %418 = vmatpush.msra.mxu0 0.0
    %419 = vmatpush.msra.mxu0 0.0
    %420 = vmatpush.msra.mxu0 0.0
    %421 = vmatpush.msra.mxu0 0.0
    %422 = vmatpush.msra.mxu0 0.0
    %423 = vmatpush.msra.mxu0 0.0
    %424 = vmatpush.msra.mxu0 0.0
    %425 = vmatpush.msra.mxu0 0.0
    %426 = vmatpush.msra.mxu0 0.0
    %427 = vmatpush.msra.mxu0 0.0
    %428 = vmatpush.msra.mxu0 0.0
    %429 = vmatpush.msra.mxu0 0.0
    %430 = vmatpush.msra.mxu0 %v17
    %431 = vmatpush.msra.mxu0 %v16
    %432 = vmatpush.msra.mxu0 %v15
    %433 = vmatpush.msra.mxu0 %v14
    %434 = vmatmul.f32.gmra.mxu0 %v416
    %v435 = vpop.f32.mrf.mxu0
    %v436 = vadd.f32 0.0, %v435
    %437 = vdwg.mxu0
    %v438 = vadd.f32 %v91, %v436
    %v439 = vxor.u32 %v438, 2147483648
    %v440 = vmul.f32 %v439, 1.442695
    %v441 = vpow.pop %v440
    %v442 = vadd.f32 %v441, 1.0
    %v443 = vrcp.pop %v442
    %v444 = vmul.f32 %v442, %v443
    %v445 = vsub.f32 1.0, %v444
    %v446 = vmul.f32 %v443, %v445
    %v447 = vadd.f32 %v443, %v446
    %vm448 = vweird.f32 %v442
    %vm449 = vweird.f32 %v443
    %vm450 = vmor %vm448, %vm449
    %v451 = vsel %vm450, %v443, %v447
    %v452 = vand.u32 2147483647, %v442
    %vm453 = vcmp.eq.f32.partialorder %v452, 8.507059e+37
    %v454 = vand.u32 %v442, 2147483648
    %v455 = vor.u32 1.1754944e-38, %v454
    %v456 = vsel %vm453, %v455, %v451
    %v457 = vmul.f32 1.0, %v456
    %v458 = vtanh.pop %v438
    %v459 = vmul.f32 %v457, %v406
    %461 = vrot.lane.b32.xlu0 %v458, 64
    %v462 = vpop.permute.xlu0 %461
    %v464 = vmul.f32 %v457, %v462
    %466 = vrot.lane.b32.xlu0 %v464, 32
    %v467 = vpop.permute.xlu0 %466
    %v469 = vadd.f32 %v459, %v467
    %v470 = vtanh.pop %v469
    %472 = vrot.lane.b32.xlu0 %v470, 64
    %v473 = vpop.permute.xlu0 %472
    %v475 = vmul.f32 %v457, %v473
    %477 = vrot.lane.b32.xlu0 %v475, 32
    %v478 = vpop.permute.xlu0 %477
    %v479 = vsel %vm99, %v478, 0
    %481 = vmatpush.msra.mxu0 0.0
    %482 = vmatpush.msra.mxu0 0.0
    %483 = vmatpush.msra.mxu0 0.0
    %484 = vmatpush.msra.mxu0 0.0
    %485 = vmatpush.msra.mxu0 0.0
    %486 = vmatpush.msra.mxu0 0.0
    %487 = vmatpush.msra.mxu0 0.0
    %488 = vmatpush.msra.mxu0 0.0
    %489 = vmatpush.msra.mxu0 0.0
    %490 = vmatpush.msra.mxu0 0.0
    %491 = vmatpush.msra.mxu0 0.0
    %492 = vmatpush.msra.mxu0 0.0
    %493 = vmatpush.msra.mxu0 %v17
    %494 = vmatpush.msra.mxu0 %v16
    %495 = vmatpush.msra.mxu0 %v15
    %496 = vmatpush.msra.mxu0 %v14
    %497 = vmatmul.f32.gmra.mxu0 %v479
    %v498 = vpop.f32.mrf.mxu0
    %v499 = vadd.f32 0.0, %v498
    %500 = vdwg.mxu0
    %v501 = vadd.f32 %v94, %v499
    %v502 = vxor.u32 %v501, 2147483648
    %v503 = vmul.f32 %v502, 1.442695
    %v504 = vpow.pop %v503
    %v505 = vadd.f32 %v504, 1.0
    %v506 = vrcp.pop %v505
    %v507 = vmul.f32 %v505, %v506
    %v508 = vsub.f32 1.0, %v507
    %v509 = vmul.f32 %v506, %v508
    %v510 = vadd.f32 %v506, %v509
    %vm511 = vweird.f32 %v505
    %vm512 = vweird.f32 %v506
    %vm513 = vmor %vm511, %vm512
    %v514 = vsel %vm513, %v506, %v510
    %v515 = vand.u32 2147483647, %v505
    %vm516 = vcmp.eq.f32.partialorder %v515, 8.507059e+37
    %v517 = vand.u32 %v505, 2147483648
    %v518 = vor.u32 1.1754944e-38, %v517
    %v519 = vsel %vm516, %v518, %v514
    %v520 = vmul.f32 1.0, %v519
    %v521 = vtanh.pop %v501
    %v522 = vmul.f32 %v520, %v469
    %524 = vrot.lane.b32.xlu0 %v521, 64
    %v525 = vpop.permute.xlu0 %524
    %v527 = vmul.f32 %v520, %v525
    %529 = vrot.lane.b32.xlu0 %v527, 32
    %v530 = vpop.permute.xlu0 %529
    %v532 = vadd.f32 %v522, %v530
    %v533 = vtanh.pop %v532
    %535 = vrot.lane.b32.xlu0 %v533, 64
    %v536 = vpop.permute.xlu0 %535
    %v538 = vmul.f32 %v520, %v536
    %540 = vrot.lane.b32.xlu0 %v538, 32
    %v541 = vpop.permute.xlu0 %540
    %v542 = vsel %vm99, %v541, 0
    %544 = vmatpush.msra.mxu0 0.0
    %545 = vmatpush.msra.mxu0 0.0
    %546 = vmatpush.msra.mxu0 0.0
    %547 = vmatpush.msra.mxu0 0.0
    %548 = vmatpush.msra.mxu0 0.0
    %549 = vmatpush.msra.mxu0 0.0
    %550 = vmatpush.msra.mxu0 0.0
    %551 = vmatpush.msra.mxu0 0.0
    %552 = vmatpush.msra.mxu0 0.0
    %553 = vmatpush.msra.mxu0 0.0
    %554 = vmatpush.msra.mxu0 0.0
    %555 = vmatpush.msra.mxu0 0.0
    %556 = vmatpush.msra.mxu0 %v17
    %557 = vmatpush.msra.mxu0 %v16
    %558 = vmatpush.msra.mxu0 %v15
    %559 = vmatpush.msra.mxu0 %v14
    %560 = vmatmul.f32.gmra.mxu0 %v542
    %v561 = vpop.f32.mrf.mxu0
    %v562 = vadd.f32 0.0, %v561
    %563 = vdwg.mxu0
    %v564 = vadd.f32 %v97, %v562
    %v565 = vxor.u32 %v564, 2147483648
    %v566 = vmul.f32 %v565, 1.442695
    %v567 = vpow.pop %v566
    %v568 = vadd.f32 %v567, 1.0
    %v569 = vrcp.pop %v568
    %v570 = vmul.f32 %v568, %v569
    %v571 = vsub.f32 1.0, %v570
    %v572 = vmul.f32 %v569, %v571
    %v573 = vadd.f32 %v569, %v572
    %vm574 = vweird.f32 %v568
    %vm575 = vweird.f32 %v569
    %vm576 = vmor %vm574, %vm575
    %v577 = vsel %vm576, %v569, %v573
    %v578 = vand.u32 2147483647, %v568
    %vm579 = vcmp.eq.f32.partialorder %v578, 8.507059e+37
    %v580 = vand.u32 %v568, 2147483648
    %v581 = vor.u32 1.1754944e-38, %v580
    %v582 = vsel %vm579, %v581, %v577
    %v583 = vmul.f32 1.0, %v582
    %v584 = vtanh.pop %v564
    %v585 = vmul.f32 %v583, %v532
    %587 = vrot.lane.b32.xlu0 %v584, 64
    %v588 = vpop.permute.xlu0 %587
    %v590 = vmul.f32 %v583, %v588
    %592 = vrot.lane.b32.xlu0 %v590, 32
    %v593 = vpop.permute.xlu0 %592
    %v595 = vadd.f32 %v585, %v593
    %v596 = vtanh.pop %v595
    %598 = vrot.lane.b32.xlu0 %v596, 64
    %v599 = vpop.permute.xlu0 %598
    %v601 = vmul.f32 %v583, %v599
    %v602 = vrot.slane %v412, 3
    %v604 = vrot.slane %v475, 2
    %v606 = vrot.slane %v538, 1
    %vm608 = vcmask 1040384
    %v609 = vsel %vm608, %v602, %v604
    %vm610 = vcmask 1041408
    %v611 = vsel %vm610, %v609, %v606
    %vm612 = vcmask 1042432
    %v613 = vsel %vm612, %v611, %v601
    %vm614 = vcmask 1043456
    %v615 = vsel %vm614, %v613, %v602
    %vm616 = vcmask 1044480
    %v617 = vsel %vm616, %v615, %v604
    %vm618 = vcmask 1045504
    %v619 = vsel %vm618, %v617, %v606
    %vm620 = vcmask 1046528
    %v621 = vsel %vm620, %v619, %v601
    %v622 = vperm.slane %v23, 0
    %624 = vrot.lane.b32.xlu0 %v621, 32
    %v625 = vpop.permute.xlu0 %624
    %v626 = vsel %vm99, %v625, 0
    %628 = vmatpush.msra.mxu0 0.0
    %629 = vmatpush.msra.mxu0 0.0
    %630 = vmatpush.msra.mxu0 0.0
    %631 = vmatpush.msra.mxu0 0.0
    %632 = vmatpush.msra.mxu0 0.0
    %633 = vmatpush.msra.mxu0 0.0
    %634 = vmatpush.msra.mxu0 0.0
    %635 = vmatpush.msra.mxu0 0.0
    %636 = vmatpush.msra.mxu0 0.0
    %637 = vmatpush.msra.mxu0 0.0
    %638 = vmatpush.msra.mxu0 0.0
    %639 = vmatpush.msra.mxu0 0.0
    %640 = vmatpush.msra.mxu0 %v21
    %641 = vmatpush.msra.mxu0 %v20
    %642 = vmatpush.msra.mxu0 %v19
    %643 = vmatpush.msra.mxu0 %v18
    %644 = vmatmul.f32.gmra.mxu0 %v626
    %v645 = vpop.f32.mrf.mxu0
    %v646 = vadd.f32 %v622, %v645
    %647 = vdwg.mxu0
    %v649 = vsel %vm99, %v646, 0
    %651 = vmatpush.xpose.msra.mxu0 0.0
    %652 = vmatpush.xpose.msra.mxu0 0.0
    %653 = vmatpush.xpose.msra.mxu0 0.0
    %654 = vmatpush.xpose.msra.mxu0 0.0
    %655 = vmatpush.xpose.msra.mxu0 0.0
    %656 = vmatpush.xpose.msra.mxu0 0.0
    %657 = vmatpush.xpose.msra.mxu0 0.0
    %658 = vmatpush.xpose.msra.mxu0 0.0
    %659 = vmatpush.xpose.msra.mxu0 0.0
    %660 = vmatpush.xpose.msra.mxu0 0.0
    %661 = vmatpush.xpose.msra.mxu0 0.0
    %662 = vmatpush.xpose.msra.mxu0 0.0
    %663 = vmatpush.xpose.msra.mxu0 0.0
    %664 = vmatpush.xpose.msra.mxu0 0.0
    %665 = vmatpush.xpose.msra.mxu0 0.0
    %666 = vmatpush.xpose.msra.mxu0 %v626
    %667 = vmatmul.f32.gmra.mxu0 %v649
    %v668 = vpop.f32.mrf.mxu0
    %v669 = vadd.f32 0.0, %v668
    %670 = vdwg.mxu0
    %v671 = vrot.slane %v646, 4
    %v672 = vrot.slane %v621, 4
    %673 = vrot.lane.b32.xlu0 %v672, 32
    %v674 = vpop.permute.xlu0 %673
    %v675 = vsel %vm99, %v671, 0
    %v677 = vsel %vm99, %v674, 0
    %679 = vmatpush.xpose.msra.mxu0 0.0
    %680 = vmatpush.xpose.msra.mxu0 0.0
    %681 = vmatpush.xpose.msra.mxu0 0.0
    %682 = vmatpush.xpose.msra.mxu0 0.0
    %683 = vmatpush.xpose.msra.mxu0 0.0
    %684 = vmatpush.xpose.msra.mxu0 0.0
    %685 = vmatpush.xpose.msra.mxu0 0.0
    %686 = vmatpush.xpose.msra.mxu0 0.0
    %687 = vmatpush.xpose.msra.mxu0 0.0
    %688 = vmatpush.xpose.msra.mxu0 0.0
    %689 = vmatpush.xpose.msra.mxu0 0.0
    %690 = vmatpush.xpose.msra.mxu0 0.0
    %691 = vmatpush.xpose.msra.mxu0 0.0
    %692 = vmatpush.xpose.msra.mxu0 0.0
    %693 = vmatpush.xpose.msra.mxu0 0.0
    %694 = vmatpush.xpose.msra.mxu0 %v677
    %695 = vmatmul.f32.gmra.mxu0 %v675
    %v696 = vpop.f32.mrf.mxu0
    %v697 = vadd.f32 0.0, %v696
    %698 = vdwg.mxu0
    %v700 = vrot.slane %v697, 4
    %v702 = vsel %vm614, %v669, %v700
    %vm703 = vcmask 31744
    %704 = vst.msk [vmem:[#allocation2] sm:$0xff] %vm703, %v702
    // Predicated region
    $region10: #{model_forward.1} parent=1 // pred_check
      _
    $region11: #{model_forward.1} parent=1 // pred_check_branch
      %706 = sbr.rel (0) target = $region13
    $region12: #{model_forward.1} parent=1 // pred_region
      %708 = vsyncadd [#allocation3], 0
      %s710 = sshll.u32 [#allocation2], 4
      %s711 = int_to_ptr.vmem [resolvable:$true] %s710
      %s712 = sshll.u32 %s2, 4
      %s713 = int_to_ptr.hbm [resolvable:$true] %s712
      %715 = dma.vmem_to_hbm [thread:$0]  %s711, 128, %s713, [#allocation3]
    $region13: #{model_forward.1} parent=1 // pred_fallthru
      _
    // Predicated region
    $region14: #{model_forward.1} parent=1 // pred_check
      _
    $region15: #{model_forward.1} parent=1 // pred_check_branch
      %717 = sbr.rel (0) target = $region17
    $region16: #{model_forward.1} parent=1 // pred_region
      %719 = dma.done [#allocation3], 128
    $region17: #{model_forward.1} parent=1 // pred_fallthru
      _
    %720 = vsyncpa [#allocation3], 1

</llo_original>
